<compile_context>
chip_gen: v6e
topology: v6e:2x2x1
jax: 0.10.0
libtpu: 0.0.40
codegen_flags: <defaults>
</compile_context>

<pallas_src>
import functools

import jax
import jax.numpy as jnp
from jax import lax
from jax.experimental import pallas as pl
from jax.experimental.pallas import tpu as pltpu


def _round_up(x, m):
    return ((x + m - 1) // m) * m


def _fused_flux_kernel(c_ref, d_ref, p10_ref, s0_ref, s1_ref, dir_ref, cau_ref,
                       w1_ref, b1_ref, w2_ref, b2_ref, w3_ref, b3_ref,
                       out_ref, cpad_ref, *, nx):
    """Single kernel step: all variables' Flux_Kernels fused (MLP + FV stencil)."""
    npad = cpad_ref.shape[1]                      # lane-padded width (multiple of 128, >= nx+1)

    # Zero-pad c into VMEM scratch (replaces the wrapper-side pad; pad lanes stay 0).
    cpad_ref[...] = jnp.zeros_like(cpad_ref)
    cpad_ref[:, :nx] = c_ref[...]
    c = cpad_ref[...]                             # (1, NP)  u[0], zero-padded

    # --- retardation-inverse MLPs, all variables in one shot -----------------------
    # (V,H,1)*(1,NP) -> (V,H,NP); elementwise stays f32.
    h1 = jnp.tanh(w1_ref[...] * c + b1_ref[...])
    # Hidden layer: batched MXU matmul, bf16 operands, f32 accumulation (single pass).
    z2 = jnp.einsum("vij,vjn->vin", w2_ref[...], h1.astype(jnp.bfloat16),
                    preferred_element_type=jnp.float32)
    h2 = jnp.tanh(z2 + b2_ref[...])               # (V, H, NP)
    # Output layer (1-row matmul) as VPU multiply + XLU sublane reduce, f32.
    o = jnp.sum(w3_ref[...] * h2, axis=1) + b3_ref[...]          # (V, NP)
    ret_inv = jax.nn.sigmoid(o) * p10_ref[...]    # (V, NP); 10**p_exp precomputed host-side

    # --- finite-volume flux: left_flux + right_flux --------------------------------
    # Interior neighbor sum u[i-1] + u[i+1]; both rolls use non-negative shifts and the
    # sum is symmetric, so the roll direction convention does not matter.
    nb = pltpu.roll(c, shift=1, axis=1) + pltpu.roll(c, shift=npad - 1, axis=1)  # (1, NP)
    # Boundary cells: the zero padding already removed the "missing" neighbor, so we
    # only add the Dirichlet value at lane 0 and the Cauchy value at lane nx-1.
    col = lax.broadcasted_iota(jnp.int32, (1, npad), 1)
    nb = (nb
          + jnp.where(col == 0, dir_ref[...], 0.0)
          + jnp.where(col == nx - 1, cau_ref[...], 0.0))          # (V, NP)

    # left_flux + right_flux = D_eff * ret_inv * (2*s0*u + s1*(u[i-1] + u[i+1]))
    flux = d_ref[...] * ret_inv * (2.0 * s0_ref[...] * c + s1_ref[...] * nb)   # (V, NP)
    out_ref[...] = flux[:, :nx]                   # drop padded lanes on the store


def prepare_flux_params(u0, mlp_weights, phys):
    """One-time packing of module parameters into kernel-ready arrays (not per RHS call)."""
    w1, b1, w2, b2, w3, b3 = mlp_weights
    d_eff, p_exp, stencil, dirichlet_val, cauchy_mult = phys
    num_vars = u0.shape[0]
    f32 = jnp.float32
    col = lambda x: jnp.asarray(x, f32).reshape(num_vars, 1)
    return dict(
        w1=jnp.asarray(w1, f32),                        # (V, H, 1)
        b1=jnp.asarray(b1, f32),                        # (V, H, 1)
        w2=jnp.asarray(w2, jnp.bfloat16),               # (V, H, H) bf16 MXU operand
        b2=jnp.asarray(b2, f32),                        # (V, H, 1)
        w3=jnp.swapaxes(jnp.asarray(w3, f32), 1, 2),    # (V, H, 1) for the reduce
        b3=jnp.asarray(b3, f32).reshape(num_vars, 1),   # (V, 1)
        d_col=col(d_eff),
        p10_col=col(10.0 ** jnp.asarray(p_exp, f32)),   # hoist 10**p_exp out of the kernel
        s0_col=col(stencil[:, 0]),
        s1_col=col(stencil[:, 1]),
        dir_col=col(dirichlet_val),
        cm_d_col=col(cauchy_mult) * col(d_eff),         # cauchy_mult * D_eff, folded once
        u0_right=col(u0[:, -1]),                        # first-step Cauchy value
    )


@jax.jit
def concentration_change_rate(t, u, prepared, prev_cauchy=None):
    """du/dt, matching ConcentrationChangeRatePredictor.forward(t, u). Fully jittable."""
    num_vars, nx = u.shape
    hdim = prepared["w1"].shape[1]
    npad = _round_up(nx + 1, 128)                 # >= nx+1 so at least one lane stays zero

    # Cauchy BC value at the right boundary (per variable), traced branch on t.
    # TODO(synk): PyTorch's Flux_Kernels keeps cauchy_val as mutable module state across
    # ODE-solver steps; here the previous value is threaded explicitly via prev_cauchy.
    prev = prepared["u0_right"] if prev_cauchy is None else prev_cauchy
    cau_col = jnp.where(t == 0.0, prepared["u0_right"],
                        (u[0, -1] - prev) * prepared["cm_d_col"])

    c_row = u[0:1, :].astype(jnp.float32)         # (1, Nx); kernel lane-pads in VMEM

    inputs = (c_row, prepared["d_col"], prepared["p10_col"], prepared["s0_col"],
              prepared["s1_col"], prepared["dir_col"], cau_col,
              prepared["w1"], prepared["b1"], prepared["w2"], prepared["b2"],
              prepared["w3"], prepared["b3"])

    def full_spec(shape):
        return pl.BlockSpec(shape, lambda i: (0,) * len(shape))

    flops = 2 * num_vars * hdim * hdim * npad + 12 * num_vars * npad
    transcendentals = num_vars * (2 * hdim + 1) * npad
    bytes_accessed = sum(int(x.size) * int(x.dtype.itemsize) for x in inputs) \
        + num_vars * nx * 4

    kernel = functools.partial(_fused_flux_kernel, nx=nx)
    du = pl.pallas_call(
        kernel,
        out_shape=jax.ShapeDtypeStruct((num_vars, nx), jnp.float32),
        grid=(1,),                                 # all variables fused into one step
        in_specs=[full_spec(x.shape) for x in inputs],
        out_specs=full_spec((num_vars, nx)),
        scratch_shapes=[pltpu.VMEM((1, npad), jnp.float32)],
        compiler_params=pltpu.CompilerParams(dimension_semantics=("arbitrary",)),
        cost_estimate=pl.CostEstimate(flops=flops, transcendentals=transcendentals,
                                      bytes_accessed=bytes_accessed),
    )(*inputs)
    return du                                     # du/dt, dim [num_features, Nx]


def reference(t, u, u0, mlp_weights, phys, prev_cauchy=None):
    """Pure-JAX f32 reference mirroring the PyTorch Flux_Kernels math."""
    w1, b1, w2, b2, w3, b3 = mlp_weights
    d_eff, p_exp, stencil, dirichlet_val, cauchy_mult = phys
    num_vars, nx = u.shape
    c = u[0].astype(jnp.float32)
    flux = []
    for v in range(num_vars):
        x = c[None, :]
        h1 = jnp.tanh(w1[v] * x + b1[v])
        h2 = jnp.tanh(w2[v] @ h1 + b2[v])
        o = w3[v] @ h2 + b3[v]
        ret = (jax.nn.sigmoid(o) * 10.0 ** p_exp[v])[0]
        if float(t) == 0.0:
            cv = u0[v, -1]
        else:
            prev = u0[v, -1] if prev_cauchy is None else prev_cauchy[v]
            cv = (c[-1] - prev) * cauchy_mult[v] * d_eff[v]
        s0, s1 = stencil[v, 0], stencil[v, 1]
        lb = d_eff[v] * ret[0] * (s0 * c[0] + s1 * dirichlet_val[v])
        ln = d_eff[v] * ret[1:] * (s0 * c[1:] + s1 * c[:-1])
        left = jnp.concatenate([lb[None], ln])
        rb = d_eff[v] * ret[-1] * (s0 * c[-1] + s1 * cv)
        rn = d_eff[v] * ret[:-1] * (s0 * c[:-1] + s1 * c[1:])
        right = jnp.concatenate([rn, rb[None]])
        flux.append(left + right)
    return jnp.stack(flux)


if __name__ == "__main__":
    num_vars, nx, hdim = 2, 26, 32   # [c, c_t], 26 control volumes (diffusion-sorption)
    key = jax.random.PRNGKey(0)
    ks = jax.random.split(key, 8)

    u0 = jax.random.uniform(ks[0], (num_vars, nx), jnp.float32)   # initial condition
    u = jax.random.uniform(ks[1], (num_vars, nx), jnp.float32)    # current state

    # Deterministic per-variable retardation-inverse MLP weights (1 -> H -> H -> 1).
    w1 = 0.5 * jax.random.normal(ks[2], (num_vars, hdim, 1), jnp.float32)
    b1 = 0.1 * jax.random.normal(ks[3], (num_vars, hdim, 1), jnp.float32)
    w2 = (1.0 / jnp.sqrt(hdim)) * jax.random.normal(ks[4], (num_vars, hdim, hdim), jnp.float32)
    b2 = 0.1 * jax.random.normal(ks[5], (num_vars, hdim, 1), jnp.float32)
    w3 = (1.0 / jnp.sqrt(hdim)) * jax.random.normal(ks[6], (num_vars, 1, hdim), jnp.float32)
    b3 = 0.1 * jax.random.normal(ks[7], (num_vars, 1, 1), jnp.float32)
    mlp = (w1, b1, w2, b2, w3, b3)

    # cfg-equivalent physical parameters (deterministic).
    dx = 1.0 / nx
    d_eff = jnp.array([0.5, 0.1], jnp.float32)
    p_exp = jnp.array([0.0, 0.0], jnp.float32)
    stencil = jnp.array([[-1.0, 1.0], [-1.0, 1.0]], jnp.float32)
    dirichlet_val = jnp.array([1.0, 1.0], jnp.float32)   # solubility at the left BC
    cauchy_mult = jnp.array([dx, dx], jnp.float32)
    phys = (d_eff, p_exp, stencil, dirichlet_val, cauchy_mult)

    prepared = prepare_flux_params(u0, mlp, phys)        # one-time parameter packing

    # t == 0 path (initial Cauchy value taken from u0).
    du0 = jax.block_until_ready(concentration_change_rate(0.0, u, prepared))
    ref0 = reference(0.0, u, u0, mlp, phys)
    assert du0.shape == (num_vars, nx)
    # Tolerance covers the bf16 MXU operands in the hidden layer (f32 accumulation).
    assert bool(jnp.allclose(du0, ref0, rtol=5e-3, atol=5e-3)), "kernel/reference mismatch (t=0)"

    # t > 0 path (Cauchy value recomputed from the previous right-boundary value).
    du1 = jax.block_until_ready(concentration_change_rate(0.3, u, prepared))
    ref1 = reference(0.3, u, u0, mlp, phys)
    assert bool(jnp.allclose(du1, ref1, rtol=5e-3, atol=5e-3)), "kernel/reference mismatch (t>0)"

    print("KERNEL_OK")
</pallas_src>

<mosaic_0001>
module attributes {stable_mosaic.version = 11 : i64} {
  func.func @_fused_flux_kernel(%arg0: i32, %arg1: memref<1x26xf32, #tpu.memory_space<vmem>>, %arg2: memref<2x1xf32, #tpu.memory_space<vmem>>, %arg3: memref<2x1xf32, #tpu.memory_space<vmem>>, %arg4: memref<2x1xf32, #tpu.memory_space<vmem>>, %arg5: memref<2x1xf32, #tpu.memory_space<vmem>>, %arg6: memref<2x1xf32, #tpu.memory_space<vmem>>, %arg7: memref<2x1xf32, #tpu.memory_space<vmem>>, %arg8: memref<2x32x1xf32, #tpu.memory_space<vmem>>, %arg9: memref<2x32x1xf32, #tpu.memory_space<vmem>>, %arg10: memref<2x32x32xbf16, #tpu.memory_space<vmem>>, %arg11: memref<2x32x1xf32, #tpu.memory_space<vmem>>, %arg12: memref<2x32x1xf32, #tpu.memory_space<vmem>>, %arg13: memref<2x1xf32, #tpu.memory_space<vmem>>, %arg14: memref<2x26xf32, #tpu.memory_space<vmem>>, %arg15: memref<1x128xf32, #tpu.memory_space<vmem>>) attributes {dimension_semantics = [#tpu.dimension_semantics<arbitrary>], iteration_bounds = array<i64: 1>, scalar_prefetch = 0 : i64, scratch_operands = 1 : i64, tpu.core_type = #tpu.core_type<tc>, window_params = [{pipeline_mode = #tpu.pipeline_mode<synchronous>, transform_indices = @transform_0, window_bounds = array<i64: 1, 26>}, {pipeline_mode = #tpu.pipeline_mode<synchronous>, transform_indices = @transform_1, window_bounds = array<i64: 2, 1>}, {pipeline_mode = #tpu.pipeline_mode<synchronous>, transform_indices = @transform_2, window_bounds = array<i64: 2, 1>}, {pipeline_mode = #tpu.pipeline_mode<synchronous>, transform_indices = @transform_3, window_bounds = array<i64: 2, 1>}, {pipeline_mode = #tpu.pipeline_mode<synchronous>, transform_indices = @transform_4, window_bounds = array<i64: 2, 1>}, {pipeline_mode = #tpu.pipeline_mode<synchronous>, transform_indices = @transform_5, window_bounds = array<i64: 2, 1>}, {pipeline_mode = #tpu.pipeline_mode<synchronous>, transform_indices = @transform_6, window_bounds = array<i64: 2, 1>}, {pipeline_mode = #tpu.pipeline_mode<synchronous>, transform_indices = @transform_7, window_bounds = array<i64: 2, 32, 1>}, {pipeline_mode = #tpu.pipeline_mode<synchronous>, transform_indices = @transform_8, window_bounds = array<i64: 2, 32, 1>}, {pipeline_mode = #tpu.pipeline_mode<synchronous>, transform_indices = @transform_9, window_bounds = array<i64: 2, 32, 32>}, {pipeline_mode = #tpu.pipeline_mode<synchronous>, transform_indices = @transform_10, window_bounds = array<i64: 2, 32, 1>}, {pipeline_mode = #tpu.pipeline_mode<synchronous>, transform_indices = @transform_11, window_bounds = array<i64: 2, 32, 1>}, {pipeline_mode = #tpu.pipeline_mode<synchronous>, transform_indices = @transform_12, window_bounds = array<i64: 2, 1>}, {pipeline_mode = #tpu.pipeline_mode<synchronous>, transform_indices = @transform_13, window_bounds = array<i64: 2, 26>}]} {
    %cst = arith.constant 0.000000e+00 : f32
    %0 = vector.broadcast %cst : f32 to vector<1x128xf32>
    %c0 = arith.constant 0 : index
    %c0_0 = arith.constant 0 : index
    %1 = vector.load %arg15[%c0, %c0_0] : memref<1x128xf32, #tpu.memory_space<vmem>>, vector<1x128xf32>
    tpu.vector_store %arg15[%c0, %c0_0], %0 {strides = array<i32>} : memref<1x128xf32, #tpu.memory_space<vmem>>, vector<1x128xf32>,
    %c0_1 = arith.constant 0 : index
    %c0_2 = arith.constant 0 : index
    %2 = vector.load %arg1[%c0_1, %c0_2] : memref<1x26xf32, #tpu.memory_space<vmem>>, vector<1x26xf32>
    %c0_3 = arith.constant 0 : index
    %c0_4 = arith.constant 0 : index
    %3 = vector.load %arg15[%c0_3, %c0_4] : memref<1x128xf32, #tpu.memory_space<vmem>>, vector<1x26xf32>
    tpu.vector_store %arg15[%c0_3, %c0_4], %2 {strides = array<i32>} : memref<1x128xf32, #tpu.memory_space<vmem>>, vector<1x26xf32>,
    %c0_5 = arith.constant 0 : index
    %c0_6 = arith.constant 0 : index
    %4 = vector.load %arg15[%c0_5, %c0_6] : memref<1x128xf32, #tpu.memory_space<vmem>>, vector<1x128xf32>
    %c0_7 = arith.constant 0 : index
    %c0_8 = arith.constant 0 : index
    %c0_9 = arith.constant 0 : index
    %5 = vector.load %arg8[%c0_7, %c0_8, %c0_9] : memref<2x32x1xf32, #tpu.memory_space<vmem>>, vector<2x32x1xf32>
    %6 = vector.shape_cast %4 : vector<1x128xf32> to vector<1x1x128xf32>
    %7 = vector.broadcast %5 : vector<2x32x1xf32> to vector<2x32x128xf32>
    %8 = vector.broadcast %6 : vector<1x1x128xf32> to vector<2x32x128xf32>
    %9 = arith.mulf %7, %8 : vector<2x32x128xf32>
    %c0_10 = arith.constant 0 : index
    %c0_11 = arith.constant 0 : index
    %c0_12 = arith.constant 0 : index
    %10 = vector.load %arg9[%c0_10, %c0_11, %c0_12] : memref<2x32x1xf32, #tpu.memory_space<vmem>>, vector<2x32x1xf32>
    %11 = vector.broadcast %10 : vector<2x32x1xf32> to vector<2x32x128xf32>
    %12 = arith.addf %9, %11 : vector<2x32x128xf32>
    %13 = math.tanh %12 : vector<2x32x128xf32>
    %c0_13 = arith.constant 0 : index
    %c0_14 = arith.constant 0 : index
    %c0_15 = arith.constant 0 : index
    %14 = vector.load %arg10[%c0_13, %c0_14, %c0_15] : memref<2x32x32xbf16, #tpu.memory_space<vmem>>, vector<2x32x32xbf16>
    %15 = arith.truncf %13 : vector<2x32x128xf32> to vector<2x32x128xbf16>
    "tpu.trace_start"() <{level = 10 : i32, message = "vij,vjn->vin"}> : () -> ()
    %cst_16 = arith.constant dense<0.000000e+00> : vector<2x32x128xf32>
    %16 = tpu.matmul %14, %15, %cst_16 {dimension_numbers = #tpu.dot_dimension_numbers<[2], [1], [1], [2], [0, 0, 0, 1, 1, 2], [0], [0]>} : vector<2x32x32xbf16>, vector<2x32x128xbf16>, vector<2x32x128xf32> -> vector<2x32x128xf32>
    "tpu.trace_stop"() : () -> ()
    %c0_17 = arith.constant 0 : index
    %c0_18 = arith.constant 0 : index
    %c0_19 = arith.constant 0 : index
    %17 = vector.load %arg11[%c0_17, %c0_18, %c0_19] : memref<2x32x1xf32, #tpu.memory_space<vmem>>, vector<2x32x1xf32>
    %18 = vector.broadcast %17 : vector<2x32x1xf32> to vector<2x32x128xf32>
    %19 = arith.addf %16, %18 : vector<2x32x128xf32>
    %20 = math.tanh %19 : vector<2x32x128xf32>
    %c0_20 = arith.constant 0 : index
    %c0_21 = arith.constant 0 : index
    %c0_22 = arith.constant 0 : index
    %21 = vector.load %arg12[%c0_20, %c0_21, %c0_22] : memref<2x32x1xf32, #tpu.memory_space<vmem>>, vector<2x32x1xf32>
    %22 = vector.broadcast %21 : vector<2x32x1xf32> to vector<2x32x128xf32>
    %23 = arith.mulf %22, %20 : vector<2x32x128xf32>
    %cst_23 = arith.constant dense<0.000000e+00> : vector<2x128xf32>
    %24 = vector.multi_reduction <add>, %23, %cst_23 [1] : vector<2x32x128xf32> to vector<2x128xf32>
    %c0_24 = arith.constant 0 : index
    %c0_25 = arith.constant 0 : index
    %25 = vector.load %arg13[%c0_24, %c0_25] : memref<2x1xf32, #tpu.memory_space<vmem>>, vector<2x1xf32>
    %26 = vector.broadcast %25 : vector<2x1xf32> to vector<2x128xf32>
    %27 = arith.addf %24, %26 : vector<2x128xf32>
    %28 = arith.negf %27 : vector<2x128xf32>
    %29 = math.exp %28 : vector<2x128xf32>
    %cst_26 = arith.constant 1.000000e+00 : f32
    %30 = vector.broadcast %cst_26 : f32 to vector<2x128xf32>
    %31 = arith.addf %30, %29 : vector<2x128xf32>
    %32 = arith.divf %30, %31 : vector<2x128xf32>
    %c0_27 = arith.constant 0 : index
    %c0_28 = arith.constant 0 : index
    %33 = vector.load %arg3[%c0_27, %c0_28] : memref<2x1xf32, #tpu.memory_space<vmem>>, vector<2x1xf32>
    %34 = vector.broadcast %33 : vector<2x1xf32> to vector<2x128xf32>
    %35 = arith.mulf %32, %34 : vector<2x128xf32>
    %c1_i32 = arith.constant 1 : i32
    %36 = tpu.dynamic_rotate %4 by %c1_i32 dim 1 : vector<1x128xf32>, i32 -> vector<1x128xf32>
    %c127_i32 = arith.constant 127 : i32
    %37 = tpu.dynamic_rotate %4 by %c127_i32 dim 1 : vector<1x128xf32>, i32 -> vector<1x128xf32>
    %38 = arith.addf %36, %37 : vector<1x128xf32>
    %39 = tpu.iota {dimensions = array<i32: 1>} : vector<1x128xi32>
    %c0_i32 = arith.constant 0 : i32
    %40 = vector.broadcast %c0_i32 : i32 to vector<1x128xi32>
    %41 = arith.cmpi eq, %39, %40 : vector<1x128xi32>
    %c0_29 = arith.constant 0 : index
    %c0_30 = arith.constant 0 : index
    %42 = vector.load %arg6[%c0_29, %c0_30] : memref<2x1xf32, #tpu.memory_space<vmem>>, vector<2x1xf32>
    %cst_31 = arith.constant 0.000000e+00 : f32
    %43 = vector.shape_cast %41 : vector<1x128xi1> to vector<1x128xi1>
    %44 = vector.broadcast %43 : vector<1x128xi1> to vector<2x128xi1>
    %45 = vector.shape_cast %42 : vector<2x1xf32> to vector<2x1xf32>
    %46 = vector.broadcast %45 : vector<2x1xf32> to vector<2x128xf32>
    %47 = vector.broadcast %cst_31 : f32 to vector<2x128xf32>
    %48 = arith.select %44, %46, %47 : vector<2x128xi1>, vector<2x128xf32>
    %49 = vector.broadcast %38 : vector<1x128xf32> to vector<2x128xf32>
    %50 = arith.addf %49, %48 : vector<2x128xf32>
    %c25_i32 = arith.constant 25 : i32
    %51 = vector.broadcast %c25_i32 : i32 to vector<1x128xi32>
    %52 = arith.cmpi eq, %39, %51 : vector<1x128xi32>
    %c0_32 = arith.constant 0 : index
    %c0_33 = arith.constant 0 : index
    %53 = vector.load %arg7[%c0_32, %c0_33] : memref<2x1xf32, #tpu.memory_space<vmem>>, vector<2x1xf32>
    %cst_34 = arith.constant 0.000000e+00 : f32
    %54 = vector.shape_cast %52 : vector<1x128xi1> to vector<1x128xi1>
    %55 = vector.broadcast %54 : vector<1x128xi1> to vector<2x128xi1>
    %56 = vector.shape_cast %53 : vector<2x1xf32> to vector<2x1xf32>
    %57 = vector.broadcast %56 : vector<2x1xf32> to vector<2x128xf32>
    %58 = vector.broadcast %cst_34 : f32 to vector<2x128xf32>
    %59 = arith.select %55, %57, %58 : vector<2x128xi1>, vector<2x128xf32>
    %60 = arith.addf %50, %59 : vector<2x128xf32>
    %c0_35 = arith.constant 0 : index
    %c0_36 = arith.constant 0 : index
    %61 = vector.load %arg2[%c0_35, %c0_36] : memref<2x1xf32, #tpu.memory_space<vmem>>, vector<2x1xf32>
    %62 = vector.broadcast %61 : vector<2x1xf32> to vector<2x128xf32>
    %63 = arith.mulf %62, %35 : vector<2x128xf32>
    %c0_37 = arith.constant 0 : index
    %c0_38 = arith.constant 0 : index
    %64 = vector.load %arg4[%c0_37, %c0_38] : memref<2x1xf32, #tpu.memory_space<vmem>>, vector<2x1xf32>
    %cst_39 = arith.constant 2.000000e+00 : f32
    %65 = vector.broadcast %cst_39 : f32 to vector<2x1xf32>
    %66 = arith.mulf %65, %64 : vector<2x1xf32>
    %67 = vector.broadcast %66 : vector<2x1xf32> to vector<2x128xf32>
    %68 = vector.broadcast %4 : vector<1x128xf32> to vector<2x128xf32>
    %69 = arith.mulf %67, %68 : vector<2x128xf32>
    %c0_40 = arith.constant 0 : index
    %c0_41 = arith.constant 0 : index
    %70 = vector.load %arg5[%c0_40, %c0_41] : memref<2x1xf32, #tpu.memory_space<vmem>>, vector<2x1xf32>
    %71 = vector.broadcast %70 : vector<2x1xf32> to vector<2x128xf32>
    %72 = arith.mulf %71, %60 : vector<2x128xf32>
    %73 = arith.addf %69, %72 : vector<2x128xf32>
    %74 = arith.mulf %63, %73 : vector<2x128xf32>
    %75 = vector.extract_strided_slice %74 {offsets = [0, 0], sizes = [2, 26], strides = [1, 1]} : vector<2x128xf32> to vector<2x26xf32>
    %c0_42 = arith.constant 0 : index
    %c0_43 = arith.constant 0 : index
    %76 = vector.load %arg14[%c0_42, %c0_43] : memref<2x26xf32, #tpu.memory_space<vmem>>, vector<2x26xf32>
    tpu.vector_store %arg14[%c0_42, %c0_43], %75 {strides = array<i32>} : memref<2x26xf32, #tpu.memory_space<vmem>>, vector<2x26xf32>,
    return
  }
  func.func @transform_0(%arg0: i32) -> (i32, i32) {
    %c0_i32 = arith.constant 0 : i32
    %c0_i32_0 = arith.constant 0 : i32
    %c0_i32_1 = arith.constant 0 : i32
    return %c0_i32, %c0_i32_0 : i32, i32
  }
  func.func @transform_1(%arg0: i32) -> (i32, i32) {
    %c0_i32 = arith.constant 0 : i32
    %c0_i32_0 = arith.constant 0 : i32
    %c0_i32_1 = arith.constant 0 : i32
    return %c0_i32, %c0_i32_0 : i32, i32
  }
  func.func @transform_2(%arg0: i32) -> (i32, i32) {
    %c0_i32 = arith.constant 0 : i32
    %c0_i32_0 = arith.constant 0 : i32
    %c0_i32_1 = arith.constant 0 : i32
    return %c0_i32, %c0_i32_0 : i32, i32
  }
  func.func @transform_3(%arg0: i32) -> (i32, i32) {
    %c0_i32 = arith.constant 0 : i32
    %c0_i32_0 = arith.constant 0 : i32
    %c0_i32_1 = arith.constant 0 : i32
    return %c0_i32, %c0_i32_0 : i32, i32
  }
  func.func @transform_4(%arg0: i32) -> (i32, i32) {
    %c0_i32 = arith.constant 0 : i32
    %c0_i32_0 = arith.constant 0 : i32
    %c0_i32_1 = arith.constant 0 : i32
    return %c0_i32, %c0_i32_0 : i32, i32
  }
  func.func @transform_5(%arg0: i32) -> (i32, i32) {
    %c0_i32 = arith.constant 0 : i32
    %c0_i32_0 = arith.constant 0 : i32
    %c0_i32_1 = arith.constant 0 : i32
    return %c0_i32, %c0_i32_0 : i32, i32
  }
  func.func @transform_6(%arg0: i32) -> (i32, i32) {
    %c0_i32 = arith.constant 0 : i32
    %c0_i32_0 = arith.constant 0 : i32
    %c0_i32_1 = arith.constant 0 : i32
    return %c0_i32, %c0_i32_0 : i32, i32
  }
  func.func @transform_7(%arg0: i32) -> (i32, i32, i32) {
    %c0_i32 = arith.constant 0 : i32
    %c0_i32_0 = arith.constant 0 : i32
    %c0_i32_1 = arith.constant 0 : i32
    %c0_i32_2 = arith.constant 0 : i32
    return %c0_i32, %c0_i32_0, %c0_i32_1 : i32, i32, i32
  }
  func.func @transform_8(%arg0: i32) -> (i32, i32, i32) {
    %c0_i32 = arith.constant 0 : i32
    %c0_i32_0 = arith.constant 0 : i32
    %c0_i32_1 = arith.constant 0 : i32
    %c0_i32_2 = arith.constant 0 : i32
    return %c0_i32, %c0_i32_0, %c0_i32_1 : i32, i32, i32
  }
  func.func @transform_9(%arg0: i32) -> (i32, i32, i32) {
    %c0_i32 = arith.constant 0 : i32
    %c0_i32_0 = arith.constant 0 : i32
    %c0_i32_1 = arith.constant 0 : i32
    %c0_i32_2 = arith.constant 0 : i32
    return %c0_i32, %c0_i32_0, %c0_i32_1 : i32, i32, i32
  }
  func.func @transform_10(%arg0: i32) -> (i32, i32, i32) {
    %c0_i32 = arith.constant 0 : i32
    %c0_i32_0 = arith.constant 0 : i32
    %c0_i32_1 = arith.constant 0 : i32
    %c0_i32_2 = arith.constant 0 : i32
    return %c0_i32, %c0_i32_0, %c0_i32_1 : i32, i32, i32
  }
  func.func @transform_11(%arg0: i32) -> (i32, i32, i32) {
    %c0_i32 = arith.constant 0 : i32
    %c0_i32_0 = arith.constant 0 : i32
    %c0_i32_1 = arith.constant 0 : i32
    %c0_i32_2 = arith.constant 0 : i32
    return %c0_i32, %c0_i32_0, %c0_i32_1 : i32, i32, i32
  }
  func.func @transform_12(%arg0: i32) -> (i32, i32) {
    %c0_i32 = arith.constant 0 : i32
    %c0_i32_0 = arith.constant 0 : i32
    %c0_i32_1 = arith.constant 0 : i32
    return %c0_i32, %c0_i32_0 : i32, i32
  }
  func.func @transform_13(%arg0: i32) -> (i32, i32) {
    %c0_i32 = arith.constant 0 : i32
    %c0_i32_0 = arith.constant 0 : i32
    %c0_i32_1 = arith.constant 0 : i32
    return %c0_i32, %c0_i32_0 : i32, i32
  }
}

</mosaic_0001>

<llo_original>
// kernel: concentration_change_rate.1
$region0: #{concentration_change_rate.1}
  #allocation0 [shape = 'u32[]', space=smem, size = 0x4, offset = 0x4, fixed_abs, tag = 'smem constant byte address 0x4 - core index']
  #allocation1 [shape = 'u32[144,128]{1,0:T(1,128)}', space=vmem, size = 0x12000, scoped, tag = 'internal scratch']
  #allocation2 [shape = 'f32[1,128]{1,0:T(1,128)}', space=vmem, size = 0x200, scoped, tag = 'scratch operand']
  %s0 = inlined_call_operand.vmem [shape: f32[1,26], index: 0, kind: input, shape index: {}]
  %s1 = inlined_call_operand.vmem [shape: f32[2,1], index: 1, kind: input, shape index: {}]
  %s2 = inlined_call_operand.vmem [shape: f32[2,1], index: 2, kind: input, shape index: {}]
  %s3 = inlined_call_operand.vmem [shape: f32[2,1], index: 3, kind: input, shape index: {}]
  %s4 = inlined_call_operand.vmem [shape: f32[2,1], index: 4, kind: input, shape index: {}]
  %s5 = inlined_call_operand.vmem [shape: f32[2,1], index: 5, kind: input, shape index: {}]
  %s6 = inlined_call_operand.vmem [shape: f32[2,1], index: 6, kind: input, shape index: {}]
  %s7 = inlined_call_operand.vmem [shape: f32[2,32,1], index: 7, kind: input, shape index: {}]
  %s8 = inlined_call_operand.vmem [shape: f32[2,32,1], index: 8, kind: input, shape index: {}]
  %s9 = inlined_call_operand.vmem [shape: bf16[2,32,32], index: 9, kind: input, shape index: {}]
  %s10 = inlined_call_operand.vmem [shape: f32[2,32,1], index: 10, kind: input, shape index: {}]
  %s11 = inlined_call_operand.vmem [shape: f32[2,32,1], index: 11, kind: input, shape index: {}]
  %s12 = inlined_call_operand.vmem [shape: f32[2,1], index: 12, kind: input, shape index: {}]
  %s13 = inlined_call_operand.hbm [shape: f32[2,26], index: 13, kind: output, shape index: {}]
  %s14 = sld [smem:[#allocation0]]
  $region62: #{concentration_change_rate.1} parent=0
    _
  %s16 = ssub.s32 1, %s14
  %s17 = scalar_select 0, %s16, %s14
  $region1: #{concentration_change_rate.1} parent=0
    #allocation3 [shape = 'u8[1024]{0}', space=vmem, size = 0x400, scoped, tag = 'output window, operand 0, single buffered']
    #allocation4 [shape = 's32[1]{0}', space=sflag, size = 0x4, scoped, tag = 'scoped memory for concentration_change_rate.1']
    %18 = vsyncpa [#allocation4], 0
    // Predicated region
    $region2: #{concentration_change_rate.1} parent=1 // pred_check
      _
    $region3: #{concentration_change_rate.1} parent=1 // pred_check_branch
      %20 = sbr.rel (0) target = $region5
    $region4: #{concentration_change_rate.1} parent=1 // pred_region
      _
    $region5: #{concentration_change_rate.1} parent=1 // pred_fallthru
      _
    // Predicated region
    $region6: #{concentration_change_rate.1} parent=1 // pred_check
      _
    $region7: #{concentration_change_rate.1} parent=1 // pred_check_branch
      %22 = sbr.rel (0) target = $region9
    $region8: #{concentration_change_rate.1} parent=1 // pred_region
      _
    $region9: #{concentration_change_rate.1} parent=1 // pred_fallthru
      _
    // Predicated region
    $region10: #{concentration_change_rate.1} parent=1 // pred_check
      _
    $region11: #{concentration_change_rate.1} parent=1 // pred_check_branch
      %24 = sbr.rel (0) target = $region13
    $region12: #{concentration_change_rate.1} parent=1 // pred_region
      _
    $region13: #{concentration_change_rate.1} parent=1 // pred_fallthru
      _
    // Predicated region
    $region14: #{concentration_change_rate.1} parent=1 // pred_check
      _
    $region15: #{concentration_change_rate.1} parent=1 // pred_check_branch
      %26 = sbr.rel (0) target = $region17
    $region16: #{concentration_change_rate.1} parent=1 // pred_region
      _
    $region17: #{concentration_change_rate.1} parent=1 // pred_fallthru
      _
    // Predicated region
    $region18: #{concentration_change_rate.1} parent=1 // pred_check
      _
    $region19: #{concentration_change_rate.1} parent=1 // pred_check_branch
      %28 = sbr.rel (0) target = $region21
    $region20: #{concentration_change_rate.1} parent=1 // pred_region
      _
    $region21: #{concentration_change_rate.1} parent=1 // pred_fallthru
      _
    // Predicated region
    $region22: #{concentration_change_rate.1} parent=1 // pred_check
      _
    $region23: #{concentration_change_rate.1} parent=1 // pred_check_branch
      %30 = sbr.rel (0) target = $region25
    $region24: #{concentration_change_rate.1} parent=1 // pred_region
      _
    $region25: #{concentration_change_rate.1} parent=1 // pred_fallthru
      _
    // Predicated region
    $region26: #{concentration_change_rate.1} parent=1 // pred_check
      _
    $region27: #{concentration_change_rate.1} parent=1 // pred_check_branch
      %32 = sbr.rel (0) target = $region29
    $region28: #{concentration_change_rate.1} parent=1 // pred_region
      _
    $region29: #{concentration_change_rate.1} parent=1 // pred_fallthru
      _
    // Predicated region
    $region30: #{concentration_change_rate.1} parent=1 // pred_check
      _
    $region31: #{concentration_change_rate.1} parent=1 // pred_check_branch
      %34 = sbr.rel (0) target = $region33
    $region32: #{concentration_change_rate.1} parent=1 // pred_region
      _
    $region33: #{concentration_change_rate.1} parent=1 // pred_fallthru
      _
    // Predicated region
    $region34: #{concentration_change_rate.1} parent=1 // pred_check
      _
    $region35: #{concentration_change_rate.1} parent=1 // pred_check_branch
      %36 = sbr.rel (0) target = $region37
    $region36: #{concentration_change_rate.1} parent=1 // pred_region
      _
    $region37: #{concentration_change_rate.1} parent=1 // pred_fallthru
      _
    // Predicated region
    $region38: #{concentration_change_rate.1} parent=1 // pred_check
      _
    $region39: #{concentration_change_rate.1} parent=1 // pred_check_branch
      %38 = sbr.rel (0) target = $region41
    $region40: #{concentration_change_rate.1} parent=1 // pred_region
      _
    $region41: #{concentration_change_rate.1} parent=1 // pred_fallthru
      _
    // Predicated region
    $region42: #{concentration_change_rate.1} parent=1 // pred_check
      _
    $region43: #{concentration_change_rate.1} parent=1 // pred_check_branch
      %40 = sbr.rel (0) target = $region45
    $region44: #{concentration_change_rate.1} parent=1 // pred_region
      _
    $region45: #{concentration_change_rate.1} parent=1 // pred_fallthru
      _
    // Predicated region
    $region46: #{concentration_change_rate.1} parent=1 // pred_check
      _
    $region47: #{concentration_change_rate.1} parent=1 // pred_check_branch
      %42 = sbr.rel (0) target = $region49
    $region48: #{concentration_change_rate.1} parent=1 // pred_region
      _
    $region49: #{concentration_change_rate.1} parent=1 // pred_fallthru
      _
    // Predicated region
    $region50: #{concentration_change_rate.1} parent=1 // pred_check
      _
    $region51: #{concentration_change_rate.1} parent=1 // pred_check_branch
      %44 = sbr.rel (0) target = $region53
    $region52: #{concentration_change_rate.1} parent=1 // pred_region
      _
    $region53: #{concentration_change_rate.1} parent=1 // pred_fallthru
      _
    %46 = vst [vmem:[#allocation2] sm:$0x1] 0.0
    %v47 = vld [vmem:[%s0] sm:$0x1]
    %vm48 = vcmask 204800
    %49 = vst.msk [vmem:[#allocation2] sm:$0x1] %vm48, %v47
    %v50 = vld [vmem:[#allocation2] sm:$0x1]
    %v51 = vld [vmem:[%s7] sm:$0xff]
    %v52 = vld [vmem:[%s7 + $0x8] sm:$0xff]
    %v53 = vld [vmem:[%s7 + $0x10] sm:$0xff]
    %v54 = vld [vmem:[%s7 + $0x18] sm:$0xff]
    %v55 = vld [vmem:[%s7 + $0x20] sm:$0xff]
    %v56 = vld [vmem:[%s7 + $0x28] sm:$0xff]
    %v57 = vld [vmem:[%s7 + $0x30] sm:$0xff]
    %v58 = vld [vmem:[%s7 + $0x38] sm:$0xff]
    %60 = vset.pattern.permute.xlu0 0
    %61 = vperm.xlu0 %60, %v51
    %v62 = vpop.permute.xlu0 %61
    %65 = vset.pattern.permute.xlu0 0
    %66 = vperm.xlu0 %65, %v52
    %v67 = vpop.permute.xlu0 %66
    %70 = vset.pattern.permute.xlu0 0
    %71 = vperm.xlu0 %70, %v53
    %v72 = vpop.permute.xlu0 %71
    %75 = vset.pattern.permute.xlu0 0
    %76 = vperm.xlu0 %75, %v54
    %v77 = vpop.permute.xlu0 %76
    %80 = vset.pattern.permute.xlu0 0
    %81 = vperm.xlu0 %80, %v55
    %v82 = vpop.permute.xlu0 %81
    %85 = vset.pattern.permute.xlu0 0
    %86 = vperm.xlu0 %85, %v56
    %v87 = vpop.permute.xlu0 %86
    %90 = vset.pattern.permute.xlu0 0
    %91 = vperm.xlu0 %90, %v57
    %v92 = vpop.permute.xlu0 %91
    %95 = vset.pattern.permute.xlu0 0
    %96 = vperm.xlu0 %95, %v58
    %v97 = vpop.permute.xlu0 %96
    %v100 = vlaneseq
    %v101 = vshrl.u32 %v100, 7
    %v102 = vsub.s32 0, %v101
    %v103 = vrot.slane %v50, %v102
    %v105 = vmul.f32 %v62, %v103
    %v106 = vmul.f32 %v67, %v103
    %v107 = vmul.f32 %v72, %v103
    %v108 = vmul.f32 %v77, %v103
    %v109 = vmul.f32 %v82, %v103
    %v110 = vmul.f32 %v87, %v103
    %v111 = vmul.f32 %v92, %v103
    %v112 = vmul.f32 %v97, %v103
    %v113 = vld [vmem:[%s8] sm:$0xff]
    %v114 = vld [vmem:[%s8 + $0x8] sm:$0xff]
    %v115 = vld [vmem:[%s8 + $0x10] sm:$0xff]
    %v116 = vld [vmem:[%s8 + $0x18] sm:$0xff]
    %v117 = vld [vmem:[%s8 + $0x20] sm:$0xff]
    %v118 = vld [vmem:[%s8 + $0x28] sm:$0xff]
    %v119 = vld [vmem:[%s8 + $0x30] sm:$0xff]
    %v120 = vld [vmem:[%s8 + $0x38] sm:$0xff]
    %122 = vset.pattern.permute.xlu0 0
    %123 = vperm.xlu0 %122, %v113
    %v124 = vpop.permute.xlu0 %123
    %127 = vset.pattern.permute.xlu0 0
    %128 = vperm.xlu0 %127, %v114
    %v129 = vpop.permute.xlu0 %128
    %132 = vset.pattern.permute.xlu0 0
    %133 = vperm.xlu0 %132, %v115
    %v134 = vpop.permute.xlu0 %133
    %137 = vset.pattern.permute.xlu0 0
    %138 = vperm.xlu0 %137, %v116
    %v139 = vpop.permute.xlu0 %138
    %142 = vset.pattern.permute.xlu0 0
    %143 = vperm.xlu0 %142, %v117
    %v144 = vpop.permute.xlu0 %143
    %147 = vset.pattern.permute.xlu0 0
    %148 = vperm.xlu0 %147, %v118
    %v149 = vpop.permute.xlu0 %148
    %152 = vset.pattern.permute.xlu0 0
    %153 = vperm.xlu0 %152, %v119
    %v154 = vpop.permute.xlu0 %153
    %157 = vset.pattern.permute.xlu0 0
    %158 = vperm.xlu0 %157, %v120
    %v159 = vpop.permute.xlu0 %158
    %v161 = vadd.f32 %v105, %v124
    %v162 = vadd.f32 %v106, %v129
    %v163 = vadd.f32 %v107, %v134
    %v164 = vadd.f32 %v108, %v139
    %v165 = vadd.f32 %v109, %v144
    %v166 = vadd.f32 %v110, %v149
    %v167 = vadd.f32 %v111, %v154
    %v168 = vadd.f32 %v112, %v159
    %v169 = vtanh.pop %v161
    %v170 = vtanh.pop %v162
    %v171 = vtanh.pop %v163
    %v172 = vtanh.pop %v164
    %v173 = vtanh.pop %v165
    %v174 = vtanh.pop %v166
    %v175 = vtanh.pop %v167
    %v176 = vtanh.pop %v168
    %v177 = vld [vmem:[%s9] sm:$0xf]
    %v178 = vld [vmem:[%s9 + $0x4] sm:$0xf]
    %v179 = vld [vmem:[%s9 + $0x8] sm:$0xf]
    %v180 = vld [vmem:[%s9 + $0xc] sm:$0xf]
    %v181 = vld [vmem:[%s9 + $0x10] sm:$0xf]
    %v182 = vld [vmem:[%s9 + $0x14] sm:$0xf]
    %v183 = vld [vmem:[%s9 + $0x18] sm:$0xf]
    %v184 = vld [vmem:[%s9 + $0x1c] sm:$0xf]
    %v185 = vpack.c.bf16 %v170, %v169
    %v186 = vpack.c.bf16 %v172, %v171
    %v187 = vpack.c.bf16 %v174, %v173
    %v188 = vpack.c.bf16 %v176, %v175
    %v189 = vld [vmem:[%s10] sm:$0xff]
    %v190 = vld [vmem:[%s10 + $0x8] sm:$0xff]
    %v191 = vld [vmem:[%s10 + $0x10] sm:$0xff]
    %v192 = vld [vmem:[%s10 + $0x18] sm:$0xff]
    %v193 = vld [vmem:[%s10 + $0x20] sm:$0xff]
    %v194 = vld [vmem:[%s10 + $0x28] sm:$0xff]
    %v195 = vld [vmem:[%s10 + $0x30] sm:$0xff]
    %v196 = vld [vmem:[%s10 + $0x38] sm:$0xff]
    %198 = vset.pattern.permute.xlu0 0
    %199 = vperm.xlu0 %198, %v189
    %v200 = vpop.permute.xlu0 %199
    %203 = vset.pattern.permute.xlu0 0
    %204 = vperm.xlu0 %203, %v190
    %v205 = vpop.permute.xlu0 %204
    %208 = vset.pattern.permute.xlu0 0
    %209 = vperm.xlu0 %208, %v191
    %v210 = vpop.permute.xlu0 %209
    %213 = vset.pattern.permute.xlu0 0
    %214 = vperm.xlu0 %213, %v192
    %v215 = vpop.permute.xlu0 %214
    %218 = vset.pattern.permute.xlu0 0
    %219 = vperm.xlu0 %218, %v193
    %v220 = vpop.permute.xlu0 %219
    %223 = vset.pattern.permute.xlu0 0
    %224 = vperm.xlu0 %223, %v194
    %v225 = vpop.permute.xlu0 %224
    %228 = vset.pattern.permute.xlu0 0
    %229 = vperm.xlu0 %228, %v195
    %v230 = vpop.permute.xlu0 %229
    %233 = vset.pattern.permute.xlu0 0
    %234 = vperm.xlu0 %233, %v196
    %v235 = vpop.permute.xlu0 %234
    %v241 = vunpack.c.l.b16 %v177
    %v242 = vunpack.c.l.b16 %v178
    %v243 = vunpack.c.l.b16 %v179
    %v244 = vunpack.c.l.b16 %v180
    %v245 = vpack.c.b16 %v242, %v241
    %v246 = vpack.c.b16 %v244, %v243
    %vm247 = vcmask 261120
    %v249 = vsel %vm247, %v245, 0
    %v252 = vsel %vm247, %v246, 0
    %254 = vmatprep.subr.bf16.mxu0 0
    %255 = vmatpush1.bf16.msra.mxu0 0
    %256 = vmatprep.subr.bf16.mxu0 0
    %257 = vmatpush1.bf16.msra.mxu0 0
    %258 = vmatprep.subr.bf16.mxu0 0
    %259 = vmatpush1.bf16.msra.mxu0 0
    %260 = vmatprep.subr.bf16.mxu0 0
    %261 = vmatpush1.bf16.msra.mxu0 0
    %262 = vmatprep.subr.bf16.mxu0 0
    %263 = vmatpush1.bf16.msra.mxu0 0
    %264 = vmatprep.subr.bf16.mxu0 0
    %265 = vmatpush1.bf16.msra.mxu0 0
    %266 = vmatprep.subr.bf16.mxu0 0
    %267 = vmatpush1.bf16.msra.mxu0 %v186
    %268 = vmatprep.subr.bf16.mxu0 0
    %269 = vmatpush1.bf16.msra.mxu0 %v185
    %270 = vmatprep.subr.bf16.mxu0 0
    %271 = vmatpush2.bf16.msra.mxu0 0
    %272 = vmatprep.subr.bf16.mxu0 0
    %273 = vmatpush2.bf16.msra.mxu0 0
    %274 = vmatprep.subr.bf16.mxu0 0
    %275 = vmatpush2.bf16.msra.mxu0 0
    %276 = vmatprep.subr.bf16.mxu0 0
    %277 = vmatpush2.bf16.msra.mxu0 0
    %278 = vmatprep.subr.bf16.mxu0 0
    %279 = vmatpush2.bf16.msra.mxu0 0
    %280 = vmatprep.subr.bf16.mxu0 0
    %281 = vmatpush2.bf16.msra.mxu0 0
    %282 = vmatprep.subr.bf16.mxu0 0
    %283 = vmatpush2.bf16.msra.mxu0 0
    %284 = vmatprep.subr.bf16.mxu0 0
    %285 = vmatpush2.bf16.msra.mxu0 0
    %286 = vmatprep.mubr.bf16.mxu0 0
    %287 = vmatmul.mubr.bf16.gmra.mxu0 %v249
    %v288 = vpop.f32.mrf.mxu0
    %v289 = vadd.f32 %v200, %v288
    %v290 = vpop.f32.mrf.mxu0
    %v291 = vpop.f32.mrf.mxu0
    %v292 = vadd.f32 %v205, %v291
    %v293 = vpop.f32.mrf.mxu0
    %294 = vmatprep.mubr.bf16.mxu0 0
    %295 = vmatmul.mubr.bf16.gmra.mxu0 %v252
    %v296 = vpop.f32.mrf.mxu0
    %v297 = vadd.f32 %v210, %v296
    %v298 = vpop.f32.mrf.mxu0
    %v299 = vpop.f32.mrf.mxu0
    %v300 = vadd.f32 %v215, %v299
    %v301 = vpop.f32.mrf.mxu0
    %302 = vdwg.mxu0
    %v307 = vunpack.c.l.b16 %v181
    %v308 = vunpack.c.l.b16 %v182
    %v309 = vunpack.c.l.b16 %v183
    %v310 = vunpack.c.l.b16 %v184
    %v311 = vpack.c.b16 %v308, %v307
    %v312 = vpack.c.b16 %v310, %v309
    %v314 = vsel %vm247, %v311, 0
    %v317 = vsel %vm247, %v312, 0
    %319 = vmatprep.subr.bf16.mxu0 0
    %320 = vmatpush1.bf16.msra.mxu0 0
    %321 = vmatprep.subr.bf16.mxu0 0
    %322 = vmatpush1.bf16.msra.mxu0 0
    %323 = vmatprep.subr.bf16.mxu0 0
    %324 = vmatpush1.bf16.msra.mxu0 0
    %325 = vmatprep.subr.bf16.mxu0 0
    %326 = vmatpush1.bf16.msra.mxu0 0
    %327 = vmatprep.subr.bf16.mxu0 0
    %328 = vmatpush1.bf16.msra.mxu0 0
    %329 = vmatprep.subr.bf16.mxu0 0
    %330 = vmatpush1.bf16.msra.mxu0 0
    %331 = vmatprep.subr.bf16.mxu0 0
    %332 = vmatpush1.bf16.msra.mxu0 %v188
    %333 = vmatprep.subr.bf16.mxu0 0
    %334 = vmatpush1.bf16.msra.mxu0 %v187
    %335 = vmatprep.subr.bf16.mxu0 0
    %336 = vmatpush2.bf16.msra.mxu0 0
    %337 = vmatprep.subr.bf16.mxu0 0
    %338 = vmatpush2.bf16.msra.mxu0 0
    %339 = vmatprep.subr.bf16.mxu0 0
    %340 = vmatpush2.bf16.msra.mxu0 0
    %341 = vmatprep.subr.bf16.mxu0 0
    %342 = vmatpush2.bf16.msra.mxu0 0
    %343 = vmatprep.subr.bf16.mxu0 0
    %344 = vmatpush2.bf16.msra.mxu0 0
    %345 = vmatprep.subr.bf16.mxu0 0
    %346 = vmatpush2.bf16.msra.mxu0 0
    %347 = vmatprep.subr.bf16.mxu0 0
    %348 = vmatpush2.bf16.msra.mxu0 0
    %349 = vmatprep.subr.bf16.mxu0 0
    %350 = vmatpush2.bf16.msra.mxu0 0
    %351 = vmatprep.mubr.bf16.mxu0 0
    %352 = vmatmul.mubr.bf16.gmra.mxu0 %v314
    %v353 = vpop.f32.mrf.mxu0
    %v354 = vadd.f32 %v220, %v353
    %v355 = vpop.f32.mrf.mxu0
    %v356 = vpop.f32.mrf.mxu0
    %v357 = vadd.f32 %v225, %v356
    %v358 = vpop.f32.mrf.mxu0
    %359 = vmatprep.mubr.bf16.mxu0 0
    %360 = vmatmul.mubr.bf16.gmra.mxu0 %v317
    %v361 = vpop.f32.mrf.mxu0
    %v362 = vadd.f32 %v230, %v361
    %v363 = vpop.f32.mrf.mxu0
    %v364 = vpop.f32.mrf.mxu0
    %v365 = vadd.f32 %v235, %v364
    %v366 = vpop.f32.mrf.mxu0
    %367 = vdwg.mxu0
    %v368 = vtanh.pop %v289
    %v369 = vtanh.pop %v292
    %v370 = vtanh.pop %v297
    %v371 = vtanh.pop %v300
    %v372 = vtanh.pop %v354
    %v373 = vtanh.pop %v357
    %v374 = vtanh.pop %v362
    %v375 = vtanh.pop %v365
    %v376 = vld [vmem:[%s11] sm:$0xff]
    %v377 = vld [vmem:[%s11 + $0x8] sm:$0xff]
    %v378 = vld [vmem:[%s11 + $0x10] sm:$0xff]
    %v379 = vld [vmem:[%s11 + $0x18] sm:$0xff]
    %v380 = vld [vmem:[%s11 + $0x20] sm:$0xff]
    %v381 = vld [vmem:[%s11 + $0x28] sm:$0xff]
    %v382 = vld [vmem:[%s11 + $0x30] sm:$0xff]
    %v383 = vld [vmem:[%s11 + $0x38] sm:$0xff]
    %385 = vset.pattern.permute.xlu0 0
    %386 = vperm.xlu0 %385, %v376
    %v387 = vpop.permute.xlu0 %386
    %390 = vset.pattern.permute.xlu0 0
    %391 = vperm.xlu0 %390, %v377
    %v392 = vpop.permute.xlu0 %391
    %395 = vset.pattern.permute.xlu0 0
    %396 = vperm.xlu0 %395, %v378
    %v397 = vpop.permute.xlu0 %396
    %400 = vset.pattern.permute.xlu0 0
    %401 = vperm.xlu0 %400, %v379
    %v402 = vpop.permute.xlu0 %401
    %405 = vset.pattern.permute.xlu0 0
    %406 = vperm.xlu0 %405, %v380
    %v407 = vpop.permute.xlu0 %406
    %410 = vset.pattern.permute.xlu0 0
    %411 = vperm.xlu0 %410, %v381
    %v412 = vpop.permute.xlu0 %411
    %415 = vset.pattern.permute.xlu0 0
    %416 = vperm.xlu0 %415, %v382
    %v417 = vpop.permute.xlu0 %416
    %420 = vset.pattern.permute.xlu0 0
    %421 = vperm.xlu0 %420, %v383
    %v422 = vpop.permute.xlu0 %421
    %v424 = vmul.f32 %v387, %v368
    %v425 = vmul.f32 %v392, %v369
    %v426 = vmul.f32 %v397, %v370
    %v427 = vmul.f32 %v402, %v371
    %v428 = vmul.f32 %v407, %v372
    %v429 = vmul.f32 %v412, %v373
    %v430 = vmul.f32 %v417, %v374
    %v431 = vmul.f32 %v422, %v375
    %v432 = vadd.f32 %v424, %v425
    %v433 = vadd.f32 %v432, %v426
    %v434 = vadd.f32 %v433, %v427
    %v435 = vrot.slane %v434, 4
    %v436 = vadd.f32 %v434, %v435
    %v437 = vrot.slane %v436, 2
    %v438 = vadd.f32 %v436, %v437
    %v439 = vrot.slane %v438, 1
    %v440 = vadd.f32 %v438, %v439
    %v441 = vadd.f32 %v428, %v429
    %v442 = vadd.f32 %v441, %v430
    %v443 = vadd.f32 %v442, %v431
    %v444 = vrot.slane %v443, 4
    %v445 = vadd.f32 %v443, %v444
    %v446 = vrot.slane %v445, 2
    %v447 = vadd.f32 %v445, %v446
    %v448 = vrot.slane %v447, 1
    %v449 = vadd.f32 %v447, %v448
    %v450 = vld [vmem:[%s12] sm:$0x3]
    %452 = vset.pattern.permute.xlu0 0
    %453 = vperm.xlu0 %452, %v450
    %v454 = vpop.permute.xlu0 %453
    %v455 = vrot.slane %v454, 1
    %v458 = vadd.f32 %v440, %v454
    %v459 = vadd.f32 %v449, %v455
    %v460 = vxor.u32 %v458, 2147483648
    %v461 = vxor.u32 %v459, 2147483648
    %v462 = vmul.f32 %v460, 1.442695
    %v463 = vpow.pop %v462
    %v464 = vmul.f32 %v461, 1.442695
    %v465 = vpow.pop %v464
    %v466 = vadd.f32 %v463, 1.0
    %v467 = vadd.f32 %v465, 1.0
    %v468 = vrcp.pop %v466
    %v469 = vmul.f32 1.0, %v468
    %v470 = vrcp.pop %v467
    %v471 = vmul.f32 1.0, %v470
    %v472 = vld [vmem:[%s2] sm:$0x3]
    %474 = vset.pattern.permute.xlu0 0
    %475 = vperm.xlu0 %474, %v472
    %v476 = vpop.permute.xlu0 %475
    %v477 = vrot.slane %v476, 1
    %v480 = vmul.f32 %v469, %v476
    %v481 = vmul.f32 %v471, %v477
    %482 = vrot.lane.b32.xlu0 %v50, 1
    %v483 = vpop.permute.xlu0 %482
    %484 = vrot.lane.b32.xlu0 %v50, 127
    %v485 = vpop.permute.xlu0 %484
    %v486 = vadd.f32 %v483, %v485
    %v487 = vlaneseq
    %v488 = vand.u32 %v487, 127
    %vm489 = vcmp.eq.s32.totalorder %v488, 0
    %v490 = vld [vmem:[%s5] sm:$0x3]
    %v491 = vsel %vm489, 1, 0
    %vm492 = vcmp.eq.s32.totalorder %v491, 1
    %494 = vset.pattern.permute.xlu0 0
    %495 = vperm.xlu0 %494, %v490
    %v496 = vpop.permute.xlu0 %495
    %v498 = vsel %vm492, %v496, 0.0
    %v499 = vlaneseq
    %v500 = vshrl.u32 %v499, 7
    %v501 = vsub.s32 0, %v500
    %v502 = vrot.slane %v486, %v501
    %v503 = vadd.f32 %v502, %v498
    %vm504 = vcmp.eq.s32.totalorder %v488, 25
    %v505 = vld [vmem:[%s6] sm:$0x3]
    %v506 = vsel %vm504, 1, 0
    %vm507 = vcmp.eq.s32.totalorder %v506, 1
    %509 = vset.pattern.permute.xlu0 0
    %510 = vperm.xlu0 %509, %v505
    %v511 = vpop.permute.xlu0 %510
    %v513 = vsel %vm507, %v511, 0.0
    %v514 = vadd.f32 %v503, %v513
    %v515 = vld [vmem:[%s1] sm:$0x3]
    %517 = vset.pattern.permute.xlu0 0
    %518 = vperm.xlu0 %517, %v515
    %v519 = vpop.permute.xlu0 %518
    %v523 = vrot.slane %v481, 7
    %vm524 = vcmask 1041409
    %v525 = vsel %vm524, %v523, %v480
    %v527 = vmul.f32 %v519, %v525
    %v528 = vld [vmem:[%s3] sm:$0x3]
    %v529 = vmul.f32 %v528, 2.0
    %531 = vset.pattern.permute.xlu0 0
    %532 = vperm.xlu0 %531, %v529
    %v533 = vpop.permute.xlu0 %532
    %v535 = vmul.f32 %v533, %v103
    %v536 = vld [vmem:[%s4] sm:$0x3]
    %538 = vset.pattern.permute.xlu0 0
    %539 = vperm.xlu0 %538, %v536
    %v540 = vpop.permute.xlu0 %539
    %v542 = vmul.f32 %v540, %v514
    %v543 = vadd.f32 %v535, %v542
    %v544 = vmul.f32 %v527, %v543
    %vm545 = vcmask 205824
    %546 = vst.msk [vmem:[#allocation3] sm:$0x3] %vm545, %v544
    // Predicated region
    $region54: #{concentration_change_rate.1} parent=1 // pred_check
      _
    $region55: #{concentration_change_rate.1} parent=1 // pred_check_branch
      %548 = sbr.rel (0) target = $region57
    $region56: #{concentration_change_rate.1} parent=1 // pred_region
      %s550 = ssub.s32 32, 32
      %551 = vsyncadd [#allocation4], %s550
      %s553 = sshll.u32 [#allocation3], 4
      %s554 = int_to_ptr.vmem [resolvable:$true] %s553
      %556 = dma.vmem_to_hbm [thread:$0]  %s554, 32, %s13, [#allocation4]
    $region57: #{concentration_change_rate.1} parent=1 // pred_fallthru
      _
    // Predicated region
    $region58: #{concentration_change_rate.1} parent=1 // pred_check
      _
    $region59: #{concentration_change_rate.1} parent=1 // pred_check_branch
      %558 = sbr.rel (0) target = $region61
    $region60: #{concentration_change_rate.1} parent=1 // pred_region
      %559 = dma.done [#allocation4], 32
    $region61: #{concentration_change_rate.1} parent=1 // pred_fallthru
      _
    %560 = vsyncpa [#allocation4], 1

</llo_original>
